<compile_context>
chip_gen: v6e
topology: v6e:2x2x1
jax: 0.10.0
libtpu: 0.0.40
codegen_flags: <defaults>
</compile_context>

<pallas_src>
import jax
import jax.numpy as jnp
from jax.experimental import pallas as pl
from jax.experimental.pallas import tpu as pltpu


def _round_up(n, k):
    return ((n + k - 1) // k) * k


def _pick_tb(B, block_b):
    """Batch-tile size.  Block rows must be a multiple of 8 or equal B."""
    block_b = max(8, _round_up(block_b, 8))
    if B > block_b:
        return block_b                    # multiple of 8; >= 2 grid steps
    # Moderately large batches that split cleanly: use two tiles so the
    # "parallel" grid axis can feed both TensorCores on v7x.
    if B >= 512 and B % 16 == 0:
        return B // 2
    return B                              # block == full dim: always legal


# ----------------------------- kernel ------------------------------------- #

def make_kernel(n_loc_rest, n_scale_rest):
    def kernel(x_ref, m_ref, base_ref, wx_ref, wm_ref, b1_ref, wsloc_ref, *rest):
        loc_rest = rest[:2 * n_loc_rest]
        scale_rest = rest[2 * n_loc_rest: 2 * (n_loc_rest + n_scale_rest)]
        loc_out_ref, scale_out_ref = rest[-2:]

        d_hid = wsloc_ref.shape[1]

        m = m_ref[...]                           # (tb, D);  m = m * 1.0
        base = base_ref[...]                     # (1, D), sublane-broadcast
        x = base + m * (x_ref[...] - base)       # == x*m + (1-m)*baseline

        # Fused first layers: [loc_net L1 | scale_net L1 (x/m part)] as one
        # wide N=2*d_hid matmul pair.  K stays split (x part + m part), which
        # avoids an in-kernel concat; K pads to the MXU tile either way.
        h1 = (jnp.dot(x, wx_ref[...], preferred_element_type=jnp.float32)
              + jnp.dot(m, wm_ref[...], preferred_element_type=jnp.float32)
              + b1_ref[...])
        h_loc = jnp.maximum(h1[:, :d_hid], 0.0)  # loc_net layer-1 activation
        s_part = h1[:, d_hid:]                   # scale_net layer-1 partial

        def run_rest(h, flat):
            n = len(flat) // 2
            for i in range(n):
                w = flat[2 * i][...]
                b = flat[2 * i + 1][...]         # (1, out) sublane-broadcast
                h = jnp.dot(h, w, preferred_element_type=jnp.float32) + b
                if i < n - 1:
                    h = jnp.maximum(h, 0.0)      # ReLU
            return h

        loc = run_rest(h_loc, loc_rest)          # (tb, D)

        # scale_net layer 1: add the loc-dependent term (detach is a no-op on
        # the forward value), then ReLU, then remaining layers.
        h_s = jnp.maximum(
            s_part + jnp.dot(loc, wsloc_ref[...],
                             preferred_element_type=jnp.float32),
            0.0)
        pre = run_rest(h_s, scale_rest)          # (tb, D)

        # numerically stable softplus
        scale = jnp.maximum(pre, 0.0) + jnp.log1p(jnp.exp(-jnp.abs(pre)))

        loc_out_ref[...] = loc * m
        scale_out_ref[...] = scale + 1e-5

    return kernel


# ----------------------------- wrapper ------------------------------------ #

def vanilla_q_phi_x(x, m, baseline, loc_params, scale_params, *, block_b=1024):
    """x, m: (B, D) float32.  Returns (loc*m, softplus(scale)+1e-5), each (B, D).

    loc_params / scale_params: lists of (w, b) with w: (in, out), b: (1, out).
    No wrapper-side relayout: inputs/outputs pass straight through pallas_call.
    """
    B, D = x.shape
    f32 = jnp.float32

    tb = _pick_tb(B, block_b)
    # If B is not a multiple of tb, Pallas masks the out-of-range rows of the
    # trailing block (OOB reads only feed rows whose writes are discarded).
    grid = ((B + tb - 1) // tb,)

    # ---- weight packing (all free, done once at trace time) ----
    wl1, bl1 = loc_params[0]
    ws1, bs1 = scale_params[0]
    wl1 = jnp.asarray(wl1, f32)            # (2D, H)
    ws1 = jnp.asarray(ws1, f32)            # (3D, H)
    bl1 = jnp.asarray(bl1, f32).reshape(1, -1)
    bs1 = jnp.asarray(bs1, f32).reshape(1, -1)

    wx_cat = jnp.concatenate([wl1[:D], ws1[D:2 * D]], axis=1)   # (D, 2H)
    wm_cat = jnp.concatenate([wl1[D:], ws1[2 * D:]], axis=1)    # (D, 2H)
    ws1_loc = ws1[:D]                                           # (D, H)
    b1_cat = jnp.concatenate([bl1, bs1], axis=1)                # (1, 2H)

    def pack_rest(params):
        flat = []
        for w, b in params[1:]:
            flat.append(jnp.asarray(w, f32))                    # (in, out)
            flat.append(jnp.asarray(b, f32).reshape(1, -1))     # (1, out)
        return flat

    loc_rest = pack_rest(loc_params)
    scale_rest = pack_rest(scale_params)
    base_row = jnp.asarray(baseline, f32).reshape(1, D)

    consts = [base_row, wx_cat, wm_cat, b1_cat, ws1_loc] + loc_rest + scale_rest

    row_spec = pl.BlockSpec((tb, D), lambda i: (i, 0))

    def full_spec(a):
        # Constant index_map: the block is identical for every grid step, so
        # it is fetched once rather than per step.
        return pl.BlockSpec(a.shape, lambda i: (0, 0))

    in_specs = [row_spec, row_spec] + [full_spec(a) for a in consts]
    out_specs = [row_spec, row_spec]

    kernel = make_kernel(len(loc_params) - 1, len(scale_params) - 1)

    loc_out, scale_out = pl.pallas_call(
        kernel,
        out_shape=(jax.ShapeDtypeStruct((B, D), f32),
                   jax.ShapeDtypeStruct((B, D), f32)),
        grid=grid,
        in_specs=in_specs,
        out_specs=out_specs,
        compiler_params=pltpu.CompilerParams(
            dimension_semantics=("parallel",)),
    )(jnp.asarray(x, f32), jnp.asarray(m, f32), *consts)

    return loc_out, scale_out


# --------------------------- param init / reference ----------------------- #

def init_linear(key, fan_in, fan_out):
    kw, kb = jax.random.split(key)
    bound = 1.0 / jnp.sqrt(jnp.float32(fan_in))
    w = jax.random.uniform(kw, (fan_in, fan_out), jnp.float32, -bound, bound)
    b = jax.random.uniform(kb, (1, fan_out), jnp.float32, -bound, bound)
    return w, b


def init_mlp(key, dims):
    keys = jax.random.split(key, len(dims) - 1)
    return [init_linear(k, dims[i], dims[i + 1]) for i, k in enumerate(keys)]


def reference(x, m, baseline, loc_params, scale_params):
    m = m * 1.0
    x = x * m + (1.0 - m) * baseline.reshape(1, -1)

    def run_mlp(h, params):
        for i, (w, b) in enumerate(params):
            h = h @ w + b
            if i < len(params) - 1:
                h = jnp.maximum(h, 0.0)
        return h

    loc = run_mlp(jnp.concatenate([x, m], -1), loc_params)
    pre = run_mlp(jnp.concatenate([loc, x, m], -1), scale_params)
    scale = jnp.maximum(pre, 0.0) + jnp.log1p(jnp.exp(-jnp.abs(pre)))
    return loc * m, scale + 1e-5


# --------------------------------- main ------------------------------------ #

if __name__ == "__main__":
    key = jax.random.PRNGKey(0)
    D, H, n_layers = 8, 32, 2                    # d_in, d_hid, n_layers

    k_x, k_m, k_base, k_loc, k_scale = jax.random.split(key, 5)
    baseline = jax.random.normal(k_base, (D,), jnp.float32)

    loc_dims = [2 * D] + [H] * n_layers + [D]
    scale_dims = [3 * D] + [H] * n_layers + [D]
    loc_params = init_mlp(k_loc, loc_dims)
    scale_params = init_mlp(k_scale, scale_dims)

    # Small batch: single grid step, block == full array dims.
    B = 16
    x = jax.random.normal(k_x, (B, D), jnp.float32)
    m = jax.random.bernoulli(k_m, 0.7, (B, D)).astype(jnp.float32)

    loc_out, scale_out = vanilla_q_phi_x(x, m, baseline, loc_params, scale_params)
    jax.block_until_ready((loc_out, scale_out))

    ref_loc, ref_scale = reference(x, m, baseline, loc_params, scale_params)
    assert loc_out.shape == (B, D) and scale_out.shape == (B, D)
    assert jnp.allclose(loc_out, ref_loc, atol=1e-4, rtol=1e-4)
    assert jnp.allclose(scale_out, ref_scale, atol=1e-4, rtol=1e-4)

    # Larger batch: exercises the multi-step "parallel" grid (2 tiles of 512).
    B2 = 1024
    k_x2, k_m2 = jax.random.split(jax.random.PRNGKey(1))
    x2 = jax.random.normal(k_x2, (B2, D), jnp.float32)
    m2 = jax.random.bernoulli(k_m2, 0.7, (B2, D)).astype(jnp.float32)

    loc2, scale2 = vanilla_q_phi_x(x2, m2, baseline, loc_params, scale_params)
    jax.block_until_ready((loc2, scale2))

    ref_loc2, ref_scale2 = reference(x2, m2, baseline, loc_params, scale_params)
    assert jnp.allclose(loc2, ref_loc2, atol=1e-4, rtol=1e-4)
    assert jnp.allclose(scale2, ref_scale2, atol=1e-4, rtol=1e-4)

    print("KERNEL_OK")
</pallas_src>

<mosaic_0001>
module attributes {stable_mosaic.version = 11 : i64} {
  func.func @kernel(%arg0: i32, %arg1: memref<16x8xf32, #tpu.memory_space<vmem>>, %arg2: memref<16x8xf32, #tpu.memory_space<vmem>>, %arg3: memref<1x8xf32, #tpu.memory_space<vmem>>, %arg4: memref<8x64xf32, #tpu.memory_space<vmem>>, %arg5: memref<8x64xf32, #tpu.memory_space<vmem>>, %arg6: memref<1x64xf32, #tpu.memory_space<vmem>>, %arg7: memref<8x32xf32, #tpu.memory_space<vmem>>, %arg8: memref<32x32xf32, #tpu.memory_space<vmem>>, %arg9: memref<1x32xf32, #tpu.memory_space<vmem>>, %arg10: memref<32x8xf32, #tpu.memory_space<vmem>>, %arg11: memref<1x8xf32, #tpu.memory_space<vmem>>, %arg12: memref<32x32xf32, #tpu.memory_space<vmem>>, %arg13: memref<1x32xf32, #tpu.memory_space<vmem>>, %arg14: memref<32x8xf32, #tpu.memory_space<vmem>>, %arg15: memref<1x8xf32, #tpu.memory_space<vmem>>, %arg16: memref<16x8xf32, #tpu.memory_space<vmem>>, %arg17: memref<16x8xf32, #tpu.memory_space<vmem>>) attributes {dimension_semantics = [#tpu.dimension_semantics<parallel>], iteration_bounds = array<i64: 1>, scalar_prefetch = 0 : i64, scratch_operands = 0 : i64, tpu.core_type = #tpu.core_type<tc>, window_params = [{transform_indices = @transform_0, window_bounds = array<i64: 16, 8>}, {transform_indices = @transform_1, window_bounds = array<i64: 16, 8>}, {pipeline_mode = #tpu.pipeline_mode<synchronous>, transform_indices = @transform_2, window_bounds = array<i64: 1, 8>}, {pipeline_mode = #tpu.pipeline_mode<synchronous>, transform_indices = @transform_3, window_bounds = array<i64: 8, 64>}, {pipeline_mode = #tpu.pipeline_mode<synchronous>, transform_indices = @transform_4, window_bounds = array<i64: 8, 64>}, {pipeline_mode = #tpu.pipeline_mode<synchronous>, transform_indices = @transform_5, window_bounds = array<i64: 1, 64>}, {pipeline_mode = #tpu.pipeline_mode<synchronous>, transform_indices = @transform_6, window_bounds = array<i64: 8, 32>}, {pipeline_mode = #tpu.pipeline_mode<synchronous>, transform_indices = @transform_7, window_bounds = array<i64: 32, 32>}, {pipeline_mode = #tpu.pipeline_mode<synchronous>, transform_indices = @transform_8, window_bounds = array<i64: 1, 32>}, {pipeline_mode = #tpu.pipeline_mode<synchronous>, transform_indices = @transform_9, window_bounds = array<i64: 32, 8>}, {pipeline_mode = #tpu.pipeline_mode<synchronous>, transform_indices = @transform_10, window_bounds = array<i64: 1, 8>}, {pipeline_mode = #tpu.pipeline_mode<synchronous>, transform_indices = @transform_11, window_bounds = array<i64: 32, 32>}, {pipeline_mode = #tpu.pipeline_mode<synchronous>, transform_indices = @transform_12, window_bounds = array<i64: 1, 32>}, {pipeline_mode = #tpu.pipeline_mode<synchronous>, transform_indices = @transform_13, window_bounds = array<i64: 32, 8>}, {pipeline_mode = #tpu.pipeline_mode<synchronous>, transform_indices = @transform_14, window_bounds = array<i64: 1, 8>}, {transform_indices = @transform_15, window_bounds = array<i64: 16, 8>}, {transform_indices = @transform_16, window_bounds = array<i64: 16, 8>}]} {
    %c0 = arith.constant 0 : index
    %c0_0 = arith.constant 0 : index
    %0 = vector.load %arg2[%c0, %c0_0] : memref<16x8xf32, #tpu.memory_space<vmem>>, vector<16x8xf32>
    %c0_1 = arith.constant 0 : index
    %c0_2 = arith.constant 0 : index
    %1 = vector.load %arg3[%c0_1, %c0_2] : memref<1x8xf32, #tpu.memory_space<vmem>>, vector<1x8xf32>
    %c0_3 = arith.constant 0 : index
    %c0_4 = arith.constant 0 : index
    %2 = vector.load %arg1[%c0_3, %c0_4] : memref<16x8xf32, #tpu.memory_space<vmem>>, vector<16x8xf32>
    %3 = vector.broadcast %1 : vector<1x8xf32> to vector<16x8xf32>
    %4 = arith.subf %2, %3 : vector<16x8xf32>
    %5 = arith.mulf %0, %4 : vector<16x8xf32>
    %6 = vector.broadcast %1 : vector<1x8xf32> to vector<16x8xf32>
    %7 = arith.addf %6, %5 : vector<16x8xf32>
    %c0_5 = arith.constant 0 : index
    %c0_6 = arith.constant 0 : index
    %8 = vector.load %arg4[%c0_5, %c0_6] : memref<8x64xf32, #tpu.memory_space<vmem>>, vector<8x64xf32>
    %cst = arith.constant dense<0.000000e+00> : vector<16x64xf32>
    %9 = tpu.matmul %7, %8, %cst {dimension_numbers = #tpu.dot_dimension_numbers<[1], [0], [0], [1], [0, 0, 1, 1], [], []>} : vector<16x8xf32>, vector<8x64xf32>, vector<16x64xf32> -> vector<16x64xf32>
    %c0_7 = arith.constant 0 : index
    %c0_8 = arith.constant 0 : index
    %10 = vector.load %arg5[%c0_7, %c0_8] : memref<8x64xf32, #tpu.memory_space<vmem>>, vector<8x64xf32>
    %cst_9 = arith.constant dense<0.000000e+00> : vector<16x64xf32>
    %11 = tpu.matmul %0, %10, %cst_9 {dimension_numbers = #tpu.dot_dimension_numbers<[1], [0], [0], [1], [0, 0, 1, 1], [], []>} : vector<16x8xf32>, vector<8x64xf32>, vector<16x64xf32> -> vector<16x64xf32>
    %12 = arith.addf %9, %11 : vector<16x64xf32>
    %c0_10 = arith.constant 0 : index
    %c0_11 = arith.constant 0 : index
    %13 = vector.load %arg6[%c0_10, %c0_11] : memref<1x64xf32, #tpu.memory_space<vmem>>, vector<1x64xf32>
    %14 = vector.broadcast %13 : vector<1x64xf32> to vector<16x64xf32>
    %15 = arith.addf %12, %14 : vector<16x64xf32>
    %16 = vector.extract_strided_slice %15 {offsets = [0, 0], sizes = [16, 32], strides = [1, 1]} : vector<16x64xf32> to vector<16x32xf32>
    %cst_12 = arith.constant 0.000000e+00 : f32
    %17 = vector.broadcast %cst_12 : f32 to vector<16x32xf32>
    %18 = arith.maximumf %16, %17 : vector<16x32xf32>
    %19 = vector.extract_strided_slice %15 {offsets = [0, 32], sizes = [16, 32], strides = [1, 1]} : vector<16x64xf32> to vector<16x32xf32>
    %c0_13 = arith.constant 0 : index
    %c0_14 = arith.constant 0 : index
    %20 = vector.load %arg8[%c0_13, %c0_14] : memref<32x32xf32, #tpu.memory_space<vmem>>, vector<32x32xf32>
    %c0_15 = arith.constant 0 : index
    %c0_16 = arith.constant 0 : index
    %21 = vector.load %arg9[%c0_15, %c0_16] : memref<1x32xf32, #tpu.memory_space<vmem>>, vector<1x32xf32>
    %cst_17 = arith.constant dense<0.000000e+00> : vector<16x32xf32>
    %22 = tpu.matmul %18, %20, %cst_17 {dimension_numbers = #tpu.dot_dimension_numbers<[1], [0], [0], [1], [0, 0, 1, 1], [], []>} : vector<16x32xf32>, vector<32x32xf32>, vector<16x32xf32> -> vector<16x32xf32>
    %23 = vector.broadcast %21 : vector<1x32xf32> to vector<16x32xf32>
    %24 = arith.addf %22, %23 : vector<16x32xf32>
    %cst_18 = arith.constant 0.000000e+00 : f32
    %25 = vector.broadcast %cst_18 : f32 to vector<16x32xf32>
    %26 = arith.maximumf %24, %25 : vector<16x32xf32>
    %c0_19 = arith.constant 0 : index
    %c0_20 = arith.constant 0 : index
    %27 = vector.load %arg10[%c0_19, %c0_20] : memref<32x8xf32, #tpu.memory_space<vmem>>, vector<32x8xf32>
    %c0_21 = arith.constant 0 : index
    %c0_22 = arith.constant 0 : index
    %28 = vector.load %arg11[%c0_21, %c0_22] : memref<1x8xf32, #tpu.memory_space<vmem>>, vector<1x8xf32>
    %cst_23 = arith.constant dense<0.000000e+00> : vector<16x8xf32>
    %29 = tpu.matmul %26, %27, %cst_23 {dimension_numbers = #tpu.dot_dimension_numbers<[1], [0], [0], [1], [0, 0, 1, 1], [], []>} : vector<16x32xf32>, vector<32x8xf32>, vector<16x8xf32> -> vector<16x8xf32>
    %30 = vector.broadcast %28 : vector<1x8xf32> to vector<16x8xf32>
    %31 = arith.addf %29, %30 : vector<16x8xf32>
    %c0_24 = arith.constant 0 : index
    %c0_25 = arith.constant 0 : index
    %32 = vector.load %arg7[%c0_24, %c0_25] : memref<8x32xf32, #tpu.memory_space<vmem>>, vector<8x32xf32>
    %cst_26 = arith.constant dense<0.000000e+00> : vector<16x32xf32>
    %33 = tpu.matmul %31, %32, %cst_26 {dimension_numbers = #tpu.dot_dimension_numbers<[1], [0], [0], [1], [0, 0, 1, 1], [], []>} : vector<16x8xf32>, vector<8x32xf32>, vector<16x32xf32> -> vector<16x32xf32>
    %34 = arith.addf %19, %33 : vector<16x32xf32>
    %cst_27 = arith.constant 0.000000e+00 : f32
    %35 = vector.broadcast %cst_27 : f32 to vector<16x32xf32>
    %36 = arith.maximumf %34, %35 : vector<16x32xf32>
    %c0_28 = arith.constant 0 : index
    %c0_29 = arith.constant 0 : index
    %37 = vector.load %arg12[%c0_28, %c0_29] : memref<32x32xf32, #tpu.memory_space<vmem>>, vector<32x32xf32>
    %c0_30 = arith.constant 0 : index
    %c0_31 = arith.constant 0 : index
    %38 = vector.load %arg13[%c0_30, %c0_31] : memref<1x32xf32, #tpu.memory_space<vmem>>, vector<1x32xf32>
    %cst_32 = arith.constant dense<0.000000e+00> : vector<16x32xf32>
    %39 = tpu.matmul %36, %37, %cst_32 {dimension_numbers = #tpu.dot_dimension_numbers<[1], [0], [0], [1], [0, 0, 1, 1], [], []>} : vector<16x32xf32>, vector<32x32xf32>, vector<16x32xf32> -> vector<16x32xf32>
    %40 = vector.broadcast %38 : vector<1x32xf32> to vector<16x32xf32>
    %41 = arith.addf %39, %40 : vector<16x32xf32>
    %cst_33 = arith.constant 0.000000e+00 : f32
    %42 = vector.broadcast %cst_33 : f32 to vector<16x32xf32>
    %43 = arith.maximumf %41, %42 : vector<16x32xf32>
    %c0_34 = arith.constant 0 : index
    %c0_35 = arith.constant 0 : index
    %44 = vector.load %arg14[%c0_34, %c0_35] : memref<32x8xf32, #tpu.memory_space<vmem>>, vector<32x8xf32>
    %c0_36 = arith.constant 0 : index
    %c0_37 = arith.constant 0 : index
    %45 = vector.load %arg15[%c0_36, %c0_37] : memref<1x8xf32, #tpu.memory_space<vmem>>, vector<1x8xf32>
    %cst_38 = arith.constant dense<0.000000e+00> : vector<16x8xf32>
    %46 = tpu.matmul %43, %44, %cst_38 {dimension_numbers = #tpu.dot_dimension_numbers<[1], [0], [0], [1], [0, 0, 1, 1], [], []>} : vector<16x32xf32>, vector<32x8xf32>, vector<16x8xf32> -> vector<16x8xf32>
    %47 = vector.broadcast %45 : vector<1x8xf32> to vector<16x8xf32>
    %48 = arith.addf %46, %47 : vector<16x8xf32>
    %cst_39 = arith.constant 0.000000e+00 : f32
    %49 = vector.broadcast %cst_39 : f32 to vector<16x8xf32>
    %50 = arith.maximumf %48, %49 : vector<16x8xf32>
    %51 = math.absf %48 : vector<16x8xf32>
    %cst_40 = arith.constant 0.000000e+00 : f32
    %52 = vector.broadcast %cst_40 : f32 to vector<16x8xf32>
    %53 = arith.subf %52, %51 : vector<16x8xf32>
    %54 = math.exp %53 : vector<16x8xf32>
    %55 = math.log1p %54 : vector<16x8xf32>
    %56 = arith.addf %50, %55 : vector<16x8xf32>
    %57 = arith.mulf %31, %0 : vector<16x8xf32>
    %c0_41 = arith.constant 0 : index
    %c0_42 = arith.constant 0 : index
    %58 = vector.load %arg16[%c0_41, %c0_42] : memref<16x8xf32, #tpu.memory_space<vmem>>, vector<16x8xf32>
    tpu.vector_store %arg16[%c0_41, %c0_42], %57 {strides = array<i32>} : memref<16x8xf32, #tpu.memory_space<vmem>>, vector<16x8xf32>,
    %cst_43 = arith.constant 9.99999974E-6 : f32
    %59 = vector.broadcast %cst_43 : f32 to vector<16x8xf32>
    %60 = arith.addf %56, %59 : vector<16x8xf32>
    %c0_44 = arith.constant 0 : index
    %c0_45 = arith.constant 0 : index
    %61 = vector.load %arg17[%c0_44, %c0_45] : memref<16x8xf32, #tpu.memory_space<vmem>>, vector<16x8xf32>
    tpu.vector_store %arg17[%c0_44, %c0_45], %60 {strides = array<i32>} : memref<16x8xf32, #tpu.memory_space<vmem>>, vector<16x8xf32>,
    return
  }
  func.func @transform_0(%arg0: i32) -> (i32, i32) {
    %c0_i32 = arith.constant 0 : i32
    %c0_i32_0 = arith.constant 0 : i32
    return %arg0, %c0_i32 : i32, i32
  }
  func.func @transform_1(%arg0: i32) -> (i32, i32) {
    %c0_i32 = arith.constant 0 : i32
    %c0_i32_0 = arith.constant 0 : i32
    return %arg0, %c0_i32 : i32, i32
  }
  func.func @transform_2(%arg0: i32) -> (i32, i32) {
    %c0_i32 = arith.constant 0 : i32
    %c0_i32_0 = arith.constant 0 : i32
    %c0_i32_1 = arith.constant 0 : i32
    return %c0_i32, %c0_i32_0 : i32, i32
  }
  func.func @transform_3(%arg0: i32) -> (i32, i32) {
    %c0_i32 = arith.constant 0 : i32
    %c0_i32_0 = arith.constant 0 : i32
    %c0_i32_1 = arith.constant 0 : i32
    return %c0_i32, %c0_i32_0 : i32, i32
  }
  func.func @transform_4(%arg0: i32) -> (i32, i32) {
    %c0_i32 = arith.constant 0 : i32
    %c0_i32_0 = arith.constant 0 : i32
    %c0_i32_1 = arith.constant 0 : i32
    return %c0_i32, %c0_i32_0 : i32, i32
  }
  func.func @transform_5(%arg0: i32) -> (i32, i32) {
    %c0_i32 = arith.constant 0 : i32
    %c0_i32_0 = arith.constant 0 : i32
    %c0_i32_1 = arith.constant 0 : i32
    return %c0_i32, %c0_i32_0 : i32, i32
  }
  func.func @transform_6(%arg0: i32) -> (i32, i32) {
    %c0_i32 = arith.constant 0 : i32
    %c0_i32_0 = arith.constant 0 : i32
    %c0_i32_1 = arith.constant 0 : i32
    return %c0_i32, %c0_i32_0 : i32, i32
  }
  func.func @transform_7(%arg0: i32) -> (i32, i32) {
    %c0_i32 = arith.constant 0 : i32
    %c0_i32_0 = arith.constant 0 : i32
    %c0_i32_1 = arith.constant 0 : i32
    return %c0_i32, %c0_i32_0 : i32, i32
  }
  func.func @transform_8(%arg0: i32) -> (i32, i32) {
    %c0_i32 = arith.constant 0 : i32
    %c0_i32_0 = arith.constant 0 : i32
    %c0_i32_1 = arith.constant 0 : i32
    return %c0_i32, %c0_i32_0 : i32, i32
  }
  func.func @transform_9(%arg0: i32) -> (i32, i32) {
    %c0_i32 = arith.constant 0 : i32
    %c0_i32_0 = arith.constant 0 : i32
    %c0_i32_1 = arith.constant 0 : i32
    return %c0_i32, %c0_i32_0 : i32, i32
  }
  func.func @transform_10(%arg0: i32) -> (i32, i32) {
    %c0_i32 = arith.constant 0 : i32
    %c0_i32_0 = arith.constant 0 : i32
    %c0_i32_1 = arith.constant 0 : i32
    return %c0_i32, %c0_i32_0 : i32, i32
  }
  func.func @transform_11(%arg0: i32) -> (i32, i32) {
    %c0_i32 = arith.constant 0 : i32
    %c0_i32_0 = arith.constant 0 : i32
    %c0_i32_1 = arith.constant 0 : i32
    return %c0_i32, %c0_i32_0 : i32, i32
  }
  func.func @transform_12(%arg0: i32) -> (i32, i32) {
    %c0_i32 = arith.constant 0 : i32
    %c0_i32_0 = arith.constant 0 : i32
    %c0_i32_1 = arith.constant 0 : i32
    return %c0_i32, %c0_i32_0 : i32, i32
  }
  func.func @transform_13(%arg0: i32) -> (i32, i32) {
    %c0_i32 = arith.constant 0 : i32
    %c0_i32_0 = arith.constant 0 : i32
    %c0_i32_1 = arith.constant 0 : i32
    return %c0_i32, %c0_i32_0 : i32, i32
  }
  func.func @transform_14(%arg0: i32) -> (i32, i32) {
    %c0_i32 = arith.constant 0 : i32
    %c0_i32_0 = arith.constant 0 : i32
    %c0_i32_1 = arith.constant 0 : i32
    return %c0_i32, %c0_i32_0 : i32, i32
  }
  func.func @transform_15(%arg0: i32) -> (i32, i32) {
    %c0_i32 = arith.constant 0 : i32
    %c0_i32_0 = arith.constant 0 : i32
    return %arg0, %c0_i32 : i32, i32
  }
  func.func @transform_16(%arg0: i32) -> (i32, i32) {
    %c0_i32 = arith.constant 0 : i32
    %c0_i32_0 = arith.constant 0 : i32
    return %arg0, %c0_i32 : i32, i32
  }
}

</mosaic_0001>

<llo_original>
// kernel: tpu_custom_call.1
$region0: #{tpu_custom_call.1}
  #allocation0 [shape = 'u32[]', space=smem, size = 0x4, offset = 0x4, fixed_abs, tag = 'smem constant byte address 0x4 - core index']
  #allocation1 [shape = 'u32[144,128]{1,0:T(1,128)}', space=vmem, size = 0x12000, scoped, tag = 'internal scratch']
  %s0 = inlined_call_operand.vmem [shape: f32[16,8], index: 0, kind: input, shape index: {}]
  %s1 = inlined_call_operand.vmem [shape: f32[16,8], index: 1, kind: input, shape index: {}]
  %s2 = inlined_call_operand.vmem [shape: f32[1,8], index: 2, kind: input, shape index: {}]
  %s3 = inlined_call_operand.vmem [shape: f32[8,64], index: 3, kind: input, shape index: {}]
  %s4 = inlined_call_operand.vmem [shape: f32[8,64], index: 4, kind: input, shape index: {}]
  %s5 = inlined_call_operand.vmem [shape: f32[1,64], index: 5, kind: input, shape index: {}]
  %s6 = inlined_call_operand.vmem [shape: f32[8,32], index: 6, kind: input, shape index: {}]
  %s7 = inlined_call_operand.vmem [shape: f32[32,32], index: 7, kind: input, shape index: {}]
  %s8 = inlined_call_operand.vmem [shape: f32[1,32], index: 8, kind: input, shape index: {}]
  %s9 = inlined_call_operand.vmem [shape: f32[32,8], index: 9, kind: input, shape index: {}]
  %s10 = inlined_call_operand.vmem [shape: f32[1,8], index: 10, kind: input, shape index: {}]
  %s11 = inlined_call_operand.vmem [shape: f32[32,32], index: 11, kind: input, shape index: {}]
  %s12 = inlined_call_operand.vmem [shape: f32[1,32], index: 12, kind: input, shape index: {}]
  %s13 = inlined_call_operand.vmem [shape: f32[32,8], index: 13, kind: input, shape index: {}]
  %s14 = inlined_call_operand.vmem [shape: f32[1,8], index: 14, kind: input, shape index: {}]
  %s15 = inlined_call_operand.vmem [shape: f32[16,8], index: 15, kind: output, shape index: {0}]
  %s16 = inlined_call_operand.vmem [shape: f32[16,8], index: 16, kind: output, shape index: {1}]
  %17 = xla_tuple %s15, %s16
  %s18 = sld [smem:[#allocation0]]
  $region78: #{tpu_custom_call.1} parent=0
    _
  %s20 = ssub.s32 1, %s18
  %s21 = scalar_select 0, %s20, %s18
  // Predicated region
  $region2: #{tpu_custom_call.1} parent=0 // pred_check
    _
  $region3: #{tpu_custom_call.1} parent=0 // pred_check_branch
    %23 = sbr.rel (0) target = $region5
  $region4: #{tpu_custom_call.1} parent=0 // pred_region
    _
  $region5: #{tpu_custom_call.1} parent=0 // pred_fallthru
    _
  // Predicated region
  $region6: #{tpu_custom_call.1} parent=0 // pred_check
    _
  $region7: #{tpu_custom_call.1} parent=0 // pred_check_branch
    %25 = sbr.rel (0) target = $region9
  $region8: #{tpu_custom_call.1} parent=0 // pred_region
    _
  $region9: #{tpu_custom_call.1} parent=0 // pred_fallthru
    _
  // Predicated region
  $region10: #{tpu_custom_call.1} parent=0 // pred_check
    _
  $region11: #{tpu_custom_call.1} parent=0 // pred_check_branch
    %27 = sbr.rel (0) target = $region13
  $region12: #{tpu_custom_call.1} parent=0 // pred_region
    _
  $region13: #{tpu_custom_call.1} parent=0 // pred_fallthru
    _
  // Predicated region
  $region14: #{tpu_custom_call.1} parent=0 // pred_check
    _
  $region15: #{tpu_custom_call.1} parent=0 // pred_check_branch
    %29 = sbr.rel (0) target = $region17
  $region16: #{tpu_custom_call.1} parent=0 // pred_region
    _
  $region17: #{tpu_custom_call.1} parent=0 // pred_fallthru
    _
  // Predicated region
  $region18: #{tpu_custom_call.1} parent=0 // pred_check
    _
  $region19: #{tpu_custom_call.1} parent=0 // pred_check_branch
    %31 = sbr.rel (0) target = $region21
  $region20: #{tpu_custom_call.1} parent=0 // pred_region
    _
  $region21: #{tpu_custom_call.1} parent=0 // pred_fallthru
    _
  // Predicated region
  $region22: #{tpu_custom_call.1} parent=0 // pred_check
    _
  $region23: #{tpu_custom_call.1} parent=0 // pred_check_branch
    %33 = sbr.rel (0) target = $region25
  $region24: #{tpu_custom_call.1} parent=0 // pred_region
    _
  $region25: #{tpu_custom_call.1} parent=0 // pred_fallthru
    _
  // Predicated region
  $region26: #{tpu_custom_call.1} parent=0 // pred_check
    _
  $region27: #{tpu_custom_call.1} parent=0 // pred_check_branch
    %35 = sbr.rel (0) target = $region29
  $region28: #{tpu_custom_call.1} parent=0 // pred_region
    _
  $region29: #{tpu_custom_call.1} parent=0 // pred_fallthru
    _
  // Predicated region
  $region30: #{tpu_custom_call.1} parent=0 // pred_check
    _
  $region31: #{tpu_custom_call.1} parent=0 // pred_check_branch
    %37 = sbr.rel (0) target = $region33
  $region32: #{tpu_custom_call.1} parent=0 // pred_region
    _
  $region33: #{tpu_custom_call.1} parent=0 // pred_fallthru
    _
  // Predicated region
  $region34: #{tpu_custom_call.1} parent=0 // pred_check
    _
  $region35: #{tpu_custom_call.1} parent=0 // pred_check_branch
    %39 = sbr.rel (0) target = $region37
  $region36: #{tpu_custom_call.1} parent=0 // pred_region
    _
  $region37: #{tpu_custom_call.1} parent=0 // pred_fallthru
    _
  // Predicated region
  $region38: #{tpu_custom_call.1} parent=0 // pred_check
    _
  $region39: #{tpu_custom_call.1} parent=0 // pred_check_branch
    %41 = sbr.rel (0) target = $region41
  $region40: #{tpu_custom_call.1} parent=0 // pred_region
    _
  $region41: #{tpu_custom_call.1} parent=0 // pred_fallthru
    _
  // Predicated region
  $region42: #{tpu_custom_call.1} parent=0 // pred_check
    _
  $region43: #{tpu_custom_call.1} parent=0 // pred_check_branch
    %43 = sbr.rel (0) target = $region45
  $region44: #{tpu_custom_call.1} parent=0 // pred_region
    _
  $region45: #{tpu_custom_call.1} parent=0 // pred_fallthru
    _
  // Predicated region
  $region46: #{tpu_custom_call.1} parent=0 // pred_check
    _
  $region47: #{tpu_custom_call.1} parent=0 // pred_check_branch
    %45 = sbr.rel (0) target = $region49
  $region48: #{tpu_custom_call.1} parent=0 // pred_region
    _
  $region49: #{tpu_custom_call.1} parent=0 // pred_fallthru
    _
  // Predicated region
  $region50: #{tpu_custom_call.1} parent=0 // pred_check
    _
  $region51: #{tpu_custom_call.1} parent=0 // pred_check_branch
    %47 = sbr.rel (0) target = $region53
  $region52: #{tpu_custom_call.1} parent=0 // pred_region
    _
  $region53: #{tpu_custom_call.1} parent=0 // pred_fallthru
    _
  // Predicated region
  $region54: #{tpu_custom_call.1} parent=0 // pred_check
    _
  $region55: #{tpu_custom_call.1} parent=0 // pred_check_branch
    %49 = sbr.rel (0) target = $region57
  $region56: #{tpu_custom_call.1} parent=0 // pred_region
    _
  $region57: #{tpu_custom_call.1} parent=0 // pred_fallthru
    _
  // Predicated region
  $region58: #{tpu_custom_call.1} parent=0 // pred_check
    _
  $region59: #{tpu_custom_call.1} parent=0 // pred_check_branch
    %51 = sbr.rel (0) target = $region61
  $region60: #{tpu_custom_call.1} parent=0 // pred_region
    _
  $region61: #{tpu_custom_call.1} parent=0 // pred_fallthru
    _
  %v52 = vld [vmem:[%s1] sm:$0xff]
  %v53 = vld [vmem:[%s1 + $0x8] sm:$0xff]
  %v54 = vld [vmem:[%s2] sm:$0x1]
  %v55 = vld [vmem:[%s0] sm:$0xff]
  %v56 = vld [vmem:[%s0 + $0x8] sm:$0xff]
  %v58 = vlaneseq
  %v59 = vshrl.u32 %v58, 7
  %v60 = vsub.s32 0, %v59
  %v61 = vrot.slane %v54, %v60
  %v63 = vsub.f32 %v55, %v61
  %v64 = vsub.f32 %v56, %v61
  %v65 = vmul.f32 %v52, %v63
  %v66 = vmul.f32 %v53, %v64
  %v67 = vadd.f32 %v61, %v65
  %v68 = vadd.f32 %v61, %v66
  %v69 = vld [vmem:[%s3] sm:$0xff]
  %v70 = vld [vmem:[%s4] sm:$0xff]
  %vm71 = vcmask 64512
  %v73 = vsel %vm71, %v52, 0
  %v76 = vsel %vm71, %v53, 0
  %78 = vmatprep.subr.mxu0 0.0
  %79 = vmatpush1.msra.mxu0 0.0
  %80 = vmatprep.subr.mxu0 0.0
  %81 = vmatpush1.msra.mxu0 0.0
  %82 = vmatprep.subr.mxu0 0.0
  %83 = vmatpush1.msra.mxu0 0.0
  %84 = vmatprep.subr.mxu0 0.0
  %85 = vmatpush1.msra.mxu0 0.0
  %86 = vmatprep.subr.mxu0 0.0
  %87 = vmatpush1.msra.mxu0 0.0
  %88 = vmatprep.subr.mxu0 0.0
  %89 = vmatpush1.msra.mxu0 0.0
  %90 = vmatprep.subr.mxu0 0.0
  %91 = vmatpush1.msra.mxu0 0.0
  %92 = vmatprep.subr.mxu0 0.0
  %93 = vmatpush1.msra.mxu0 0.0
  %94 = vmatprep.subr.mxu0 0.0
  %95 = vmatpush1.msra.mxu0 0.0
  %96 = vmatprep.subr.mxu0 0.0
  %97 = vmatpush1.msra.mxu0 0.0
  %98 = vmatprep.subr.mxu0 0.0
  %99 = vmatpush1.msra.mxu0 0.0
  %100 = vmatprep.subr.mxu0 0.0
  %101 = vmatpush1.msra.mxu0 0.0
  %102 = vmatprep.subr.mxu0 0.0
  %103 = vmatpush1.msra.mxu0 0.0
  %104 = vmatprep.subr.mxu0 0.0
  %105 = vmatpush1.msra.mxu0 0.0
  %106 = vmatprep.subr.mxu0 0.0
  %107 = vmatpush1.msra.mxu0 0.0
  %108 = vmatprep.subr.mxu0 0.0
  %109 = vmatpush1.msra.mxu0 %v70
  %110 = vmatprep.subr.mxu0 0.0
  %111 = vmatpush2.msra.mxu0 0.0
  %112 = vmatprep.subr.mxu0 0.0
  %113 = vmatpush2.msra.mxu0 0.0
  %114 = vmatprep.subr.mxu0 0.0
  %115 = vmatpush2.msra.mxu0 0.0
  %116 = vmatprep.subr.mxu0 0.0
  %117 = vmatpush2.msra.mxu0 0.0
  %118 = vmatprep.subr.mxu0 0.0
  %119 = vmatpush2.msra.mxu0 0.0
  %120 = vmatprep.subr.mxu0 0.0
  %121 = vmatpush2.msra.mxu0 0.0
  %122 = vmatprep.subr.mxu0 0.0
  %123 = vmatpush2.msra.mxu0 0.0
  %124 = vmatprep.subr.mxu0 0.0
  %125 = vmatpush2.msra.mxu0 0.0
  %126 = vmatprep.subr.mxu0 0.0
  %127 = vmatpush2.msra.mxu0 0.0
  %128 = vmatprep.subr.mxu0 0.0
  %129 = vmatpush2.msra.mxu0 0.0
  %130 = vmatprep.subr.mxu0 0.0
  %131 = vmatpush2.msra.mxu0 0.0
  %132 = vmatprep.subr.mxu0 0.0
  %133 = vmatpush2.msra.mxu0 0.0
  %134 = vmatprep.subr.mxu0 0.0
  %135 = vmatpush2.msra.mxu0 0.0
  %136 = vmatprep.subr.mxu0 0.0
  %137 = vmatpush2.msra.mxu0 0.0
  %138 = vmatprep.subr.mxu0 0.0
  %139 = vmatpush2.msra.mxu0 0.0
  %140 = vmatprep.subr.mxu0 0.0
  %141 = vmatpush2.msra.mxu0 0.0
  %142 = vmatprep.mubr.f32.mxu0 0.0
  %143 = vmatmul.mubr.f32.gmra.mxu0 %v73
  %v144 = vpop.f32.mrf.mxu0
  %v145 = vadd.f32 0.0, %v144
  %v146 = vpop.f32.mrf.mxu0
  %147 = vmatprep.mubr.f32.mxu0 0.0
  %148 = vmatmul.mubr.f32.gmra.mxu0 %v76
  %v149 = vpop.f32.mrf.mxu0
  %v150 = vadd.f32 0.0, %v149
  %v151 = vpop.f32.mrf.mxu0
  %152 = vdwg.mxu0
  %v154 = vsel %vm71, %v67, 0
  %v157 = vsel %vm71, %v68, 0
  %159 = vmatprep.subr.mxu0 0.0
  %160 = vmatpush1.msra.mxu0 0.0
  %161 = vmatprep.subr.mxu0 0.0
  %162 = vmatpush1.msra.mxu0 0.0
  %163 = vmatprep.subr.mxu0 0.0
  %164 = vmatpush1.msra.mxu0 0.0
  %165 = vmatprep.subr.mxu0 0.0
  %166 = vmatpush1.msra.mxu0 0.0
  %167 = vmatprep.subr.mxu0 0.0
  %168 = vmatpush1.msra.mxu0 0.0
  %169 = vmatprep.subr.mxu0 0.0
  %170 = vmatpush1.msra.mxu0 0.0
  %171 = vmatprep.subr.mxu0 0.0
  %172 = vmatpush1.msra.mxu0 0.0
  %173 = vmatprep.subr.mxu0 0.0
  %174 = vmatpush1.msra.mxu0 0.0
  %175 = vmatprep.subr.mxu0 0.0
  %176 = vmatpush1.msra.mxu0 0.0
  %177 = vmatprep.subr.mxu0 0.0
  %178 = vmatpush1.msra.mxu0 0.0
  %179 = vmatprep.subr.mxu0 0.0
  %180 = vmatpush1.msra.mxu0 0.0
  %181 = vmatprep.subr.mxu0 0.0
  %182 = vmatpush1.msra.mxu0 0.0
  %183 = vmatprep.subr.mxu0 0.0
  %184 = vmatpush1.msra.mxu0 0.0
  %185 = vmatprep.subr.mxu0 0.0
  %186 = vmatpush1.msra.mxu0 0.0
  %187 = vmatprep.subr.mxu0 0.0
  %188 = vmatpush1.msra.mxu0 0.0
  %189 = vmatprep.subr.mxu0 0.0
  %190 = vmatpush1.msra.mxu0 %v69
  %191 = vmatprep.subr.mxu0 0.0
  %192 = vmatpush2.msra.mxu0 0.0
  %193 = vmatprep.subr.mxu0 0.0
  %194 = vmatpush2.msra.mxu0 0.0
  %195 = vmatprep.subr.mxu0 0.0
  %196 = vmatpush2.msra.mxu0 0.0
  %197 = vmatprep.subr.mxu0 0.0
  %198 = vmatpush2.msra.mxu0 0.0
  %199 = vmatprep.subr.mxu0 0.0
  %200 = vmatpush2.msra.mxu0 0.0
  %201 = vmatprep.subr.mxu0 0.0
  %202 = vmatpush2.msra.mxu0 0.0
  %203 = vmatprep.subr.mxu0 0.0
  %204 = vmatpush2.msra.mxu0 0.0
  %205 = vmatprep.subr.mxu0 0.0
  %206 = vmatpush2.msra.mxu0 0.0
  %207 = vmatprep.subr.mxu0 0.0
  %208 = vmatpush2.msra.mxu0 0.0
  %209 = vmatprep.subr.mxu0 0.0
  %210 = vmatpush2.msra.mxu0 0.0
  %211 = vmatprep.subr.mxu0 0.0
  %212 = vmatpush2.msra.mxu0 0.0
  %213 = vmatprep.subr.mxu0 0.0
  %214 = vmatpush2.msra.mxu0 0.0
  %215 = vmatprep.subr.mxu0 0.0
  %216 = vmatpush2.msra.mxu0 0.0
  %217 = vmatprep.subr.mxu0 0.0
  %218 = vmatpush2.msra.mxu0 0.0
  %219 = vmatprep.subr.mxu0 0.0
  %220 = vmatpush2.msra.mxu0 0.0
  %221 = vmatprep.subr.mxu0 0.0
  %222 = vmatpush2.msra.mxu0 0.0
  %223 = vmatprep.mubr.f32.mxu0 0.0
  %224 = vmatmul.mubr.f32.gmra.mxu0 %v154
  %v225 = vpop.f32.mrf.mxu0
  %v226 = vadd.f32 %v145, %v225
  %v227 = vpop.f32.mrf.mxu0
  %228 = vmatprep.mubr.f32.mxu0 0.0
  %229 = vmatmul.mubr.f32.gmra.mxu0 %v157
  %v230 = vpop.f32.mrf.mxu0
  %v231 = vadd.f32 %v150, %v230
  %v232 = vpop.f32.mrf.mxu0
  %233 = vdwg.mxu0
  %v234 = vld [vmem:[%s5] sm:$0x1]
  %v236 = vlaneseq
  %v237 = vshrl.u32 %v236, 7
  %v238 = vsub.s32 0, %v237
  %v239 = vrot.slane %v234, %v238
  %v241 = vadd.f32 %v226, %v239
  %v242 = vadd.f32 %v231, %v239
  %v243 = vmax.f32 %v241, 0.0
  %v244 = vmax.f32 %v242, 0.0
  %v245 = vld [vmem:[%s7] sm:$0xff]
  %v246 = vld [vmem:[%s7 + $0x8] sm:$0xff]
  %v247 = vld [vmem:[%s7 + $0x10] sm:$0xff]
  %v248 = vld [vmem:[%s7 + $0x18] sm:$0xff]
  %v249 = vld [vmem:[%s8] sm:$0x1]
  %v251 = vlaneseq
  %v252 = vshrl.u32 %v251, 7
  %v253 = vsub.s32 0, %v252
  %v254 = vrot.slane %v249, %v253
  %vm256 = vcmask 261120
  %v258 = vsel %vm256, %v243, 0
  %v261 = vsel %vm256, %v244, 0
  %263 = vmatprep.subr.mxu0 0.0
  %264 = vmatpush1.msra.mxu0 0.0
  %265 = vmatprep.subr.mxu0 0.0
  %266 = vmatpush1.msra.mxu0 0.0
  %267 = vmatprep.subr.mxu0 0.0
  %268 = vmatpush1.msra.mxu0 0.0
  %269 = vmatprep.subr.mxu0 0.0
  %270 = vmatpush1.msra.mxu0 0.0
  %271 = vmatprep.subr.mxu0 0.0
  %272 = vmatpush1.msra.mxu0 0.0
  %273 = vmatprep.subr.mxu0 0.0
  %274 = vmatpush1.msra.mxu0 0.0
  %275 = vmatprep.subr.mxu0 0.0
  %276 = vmatpush1.msra.mxu0 0.0
  %277 = vmatprep.subr.mxu0 0.0
  %278 = vmatpush1.msra.mxu0 0.0
  %279 = vmatprep.subr.mxu0 0.0
  %280 = vmatpush1.msra.mxu0 0.0
  %281 = vmatprep.subr.mxu0 0.0
  %282 = vmatpush1.msra.mxu0 0.0
  %283 = vmatprep.subr.mxu0 0.0
  %284 = vmatpush1.msra.mxu0 0.0
  %285 = vmatprep.subr.mxu0 0.0
  %286 = vmatpush1.msra.mxu0 0.0
  %287 = vmatprep.subr.mxu0 0.0
  %288 = vmatpush1.msra.mxu0 %v248
  %289 = vmatprep.subr.mxu0 0.0
  %290 = vmatpush1.msra.mxu0 %v247
  %291 = vmatprep.subr.mxu0 0.0
  %292 = vmatpush1.msra.mxu0 %v246
  %293 = vmatprep.subr.mxu0 0.0
  %294 = vmatpush1.msra.mxu0 %v245
  %295 = vmatprep.subr.mxu0 0.0
  %296 = vmatpush2.msra.mxu0 0.0
  %297 = vmatprep.subr.mxu0 0.0
  %298 = vmatpush2.msra.mxu0 0.0
  %299 = vmatprep.subr.mxu0 0.0
  %300 = vmatpush2.msra.mxu0 0.0
  %301 = vmatprep.subr.mxu0 0.0
  %302 = vmatpush2.msra.mxu0 0.0
  %303 = vmatprep.subr.mxu0 0.0
  %304 = vmatpush2.msra.mxu0 0.0
  %305 = vmatprep.subr.mxu0 0.0
  %306 = vmatpush2.msra.mxu0 0.0
  %307 = vmatprep.subr.mxu0 0.0
  %308 = vmatpush2.msra.mxu0 0.0
  %309 = vmatprep.subr.mxu0 0.0
  %310 = vmatpush2.msra.mxu0 0.0
  %311 = vmatprep.subr.mxu0 0.0
  %312 = vmatpush2.msra.mxu0 0.0
  %313 = vmatprep.subr.mxu0 0.0
  %314 = vmatpush2.msra.mxu0 0.0
  %315 = vmatprep.subr.mxu0 0.0
  %316 = vmatpush2.msra.mxu0 0.0
  %317 = vmatprep.subr.mxu0 0.0
  %318 = vmatpush2.msra.mxu0 0.0
  %319 = vmatprep.subr.mxu0 0.0
  %320 = vmatpush2.msra.mxu0 0.0
  %321 = vmatprep.subr.mxu0 0.0
  %322 = vmatpush2.msra.mxu0 0.0
  %323 = vmatprep.subr.mxu0 0.0
  %324 = vmatpush2.msra.mxu0 0.0
  %325 = vmatprep.subr.mxu0 0.0
  %326 = vmatpush2.msra.mxu0 0.0
  %327 = vmatprep.mubr.f32.mxu0 0.0
  %328 = vmatmul.mubr.f32.gmra.mxu0 %v258
  %v329 = vpop.f32.mrf.mxu0
  %v330 = vadd.f32 %v254, %v329
  %v331 = vpop.f32.mrf.mxu0
  %332 = vmatprep.mubr.f32.mxu0 0.0
  %333 = vmatmul.mubr.f32.gmra.mxu0 %v261
  %v334 = vpop.f32.mrf.mxu0
  %v335 = vadd.f32 %v254, %v334
  %v336 = vpop.f32.mrf.mxu0
  %337 = vdwg.mxu0
  %v338 = vmax.f32 %v330, 0.0
  %v339 = vmax.f32 %v335, 0.0
  %v340 = vld [vmem:[%s9] sm:$0xff]
  %v341 = vld [vmem:[%s9 + $0x8] sm:$0xff]
  %v342 = vld [vmem:[%s9 + $0x10] sm:$0xff]
  %v343 = vld [vmem:[%s9 + $0x18] sm:$0xff]
  %v344 = vld [vmem:[%s10] sm:$0x1]
  %v346 = vlaneseq
  %v347 = vshrl.u32 %v346, 7
  %v348 = vsub.s32 0, %v347
  %v349 = vrot.slane %v344, %v348
  %v352 = vsel %vm256, %v338, 0
  %v355 = vsel %vm256, %v339, 0
  %357 = vmatprep.subr.mxu0 0.0
  %358 = vmatpush1.msra.mxu0 0.0
  %359 = vmatprep.subr.mxu0 0.0
  %360 = vmatpush1.msra.mxu0 0.0
  %361 = vmatprep.subr.mxu0 0.0
  %362 = vmatpush1.msra.mxu0 0.0
  %363 = vmatprep.subr.mxu0 0.0
  %364 = vmatpush1.msra.mxu0 0.0
  %365 = vmatprep.subr.mxu0 0.0
  %366 = vmatpush1.msra.mxu0 0.0
  %367 = vmatprep.subr.mxu0 0.0
  %368 = vmatpush1.msra.mxu0 0.0
  %369 = vmatprep.subr.mxu0 0.0
  %370 = vmatpush1.msra.mxu0 0.0
  %371 = vmatprep.subr.mxu0 0.0
  %372 = vmatpush1.msra.mxu0 0.0
  %373 = vmatprep.subr.mxu0 0.0
  %374 = vmatpush1.msra.mxu0 0.0
  %375 = vmatprep.subr.mxu0 0.0
  %376 = vmatpush1.msra.mxu0 0.0
  %377 = vmatprep.subr.mxu0 0.0
  %378 = vmatpush1.msra.mxu0 0.0
  %379 = vmatprep.subr.mxu0 0.0
  %380 = vmatpush1.msra.mxu0 0.0
  %381 = vmatprep.subr.mxu0 0.0
  %382 = vmatpush1.msra.mxu0 %v343
  %383 = vmatprep.subr.mxu0 0.0
  %384 = vmatpush1.msra.mxu0 %v342
  %385 = vmatprep.subr.mxu0 0.0
  %386 = vmatpush1.msra.mxu0 %v341
  %387 = vmatprep.subr.mxu0 0.0
  %388 = vmatpush1.msra.mxu0 %v340
  %389 = vmatprep.subr.mxu0 0.0
  %390 = vmatpush2.msra.mxu0 0.0
  %391 = vmatprep.subr.mxu0 0.0
  %392 = vmatpush2.msra.mxu0 0.0
  %393 = vmatprep.subr.mxu0 0.0
  %394 = vmatpush2.msra.mxu0 0.0
  %395 = vmatprep.subr.mxu0 0.0
  %396 = vmatpush2.msra.mxu0 0.0
  %397 = vmatprep.subr.mxu0 0.0
  %398 = vmatpush2.msra.mxu0 0.0
  %399 = vmatprep.subr.mxu0 0.0
  %400 = vmatpush2.msra.mxu0 0.0
  %401 = vmatprep.subr.mxu0 0.0
  %402 = vmatpush2.msra.mxu0 0.0
  %403 = vmatprep.subr.mxu0 0.0
  %404 = vmatpush2.msra.mxu0 0.0
  %405 = vmatprep.subr.mxu0 0.0
  %406 = vmatpush2.msra.mxu0 0.0
  %407 = vmatprep.subr.mxu0 0.0
  %408 = vmatpush2.msra.mxu0 0.0
  %409 = vmatprep.subr.mxu0 0.0
  %410 = vmatpush2.msra.mxu0 0.0
  %411 = vmatprep.subr.mxu0 0.0
  %412 = vmatpush2.msra.mxu0 0.0
  %413 = vmatprep.subr.mxu0 0.0
  %414 = vmatpush2.msra.mxu0 0.0
  %415 = vmatprep.subr.mxu0 0.0
  %416 = vmatpush2.msra.mxu0 0.0
  %417 = vmatprep.subr.mxu0 0.0
  %418 = vmatpush2.msra.mxu0 0.0
  %419 = vmatprep.subr.mxu0 0.0
  %420 = vmatpush2.msra.mxu0 0.0
  %421 = vmatprep.mubr.f32.mxu0 0.0
  %422 = vmatmul.mubr.f32.gmra.mxu0 %v352
  %v423 = vpop.f32.mrf.mxu0
  %v424 = vadd.f32 %v349, %v423
  %v425 = vpop.f32.mrf.mxu0
  %426 = vmatprep.mubr.f32.mxu0 0.0
  %427 = vmatmul.mubr.f32.gmra.mxu0 %v355
  %v428 = vpop.f32.mrf.mxu0
  %v429 = vadd.f32 %v349, %v428
  %v430 = vpop.f32.mrf.mxu0
  %431 = vdwg.mxu0
  %v432 = vld [vmem:[%s6] sm:$0xff]
  %v434 = vsel %vm71, %v424, 0
  %v437 = vsel %vm71, %v429, 0
  %439 = vmatprep.subr.mxu0 0.0
  %440 = vmatpush1.msra.mxu0 0.0
  %441 = vmatprep.subr.mxu0 0.0
  %442 = vmatpush1.msra.mxu0 0.0
  %443 = vmatprep.subr.mxu0 0.0
  %444 = vmatpush1.msra.mxu0 0.0
  %445 = vmatprep.subr.mxu0 0.0
  %446 = vmatpush1.msra.mxu0 0.0
  %447 = vmatprep.subr.mxu0 0.0
  %448 = vmatpush1.msra.mxu0 0.0
  %449 = vmatprep.subr.mxu0 0.0
  %450 = vmatpush1.msra.mxu0 0.0
  %451 = vmatprep.subr.mxu0 0.0
  %452 = vmatpush1.msra.mxu0 0.0
  %453 = vmatprep.subr.mxu0 0.0
  %454 = vmatpush1.msra.mxu0 0.0
  %455 = vmatprep.subr.mxu0 0.0
  %456 = vmatpush1.msra.mxu0 0.0
  %457 = vmatprep.subr.mxu0 0.0
  %458 = vmatpush1.msra.mxu0 0.0
  %459 = vmatprep.subr.mxu0 0.0
  %460 = vmatpush1.msra.mxu0 0.0
  %461 = vmatprep.subr.mxu0 0.0
  %462 = vmatpush1.msra.mxu0 0.0
  %463 = vmatprep.subr.mxu0 0.0
  %464 = vmatpush1.msra.mxu0 0.0
  %465 = vmatprep.subr.mxu0 0.0
  %466 = vmatpush1.msra.mxu0 0.0
  %467 = vmatprep.subr.mxu0 0.0
  %468 = vmatpush1.msra.mxu0 0.0
  %469 = vmatprep.subr.mxu0 0.0
  %470 = vmatpush1.msra.mxu0 %v432
  %471 = vmatprep.subr.mxu0 0.0
  %472 = vmatpush2.msra.mxu0 0.0
  %473 = vmatprep.subr.mxu0 0.0
  %474 = vmatpush2.msra.mxu0 0.0
  %475 = vmatprep.subr.mxu0 0.0
  %476 = vmatpush2.msra.mxu0 0.0
  %477 = vmatprep.subr.mxu0 0.0
  %478 = vmatpush2.msra.mxu0 0.0
  %479 = vmatprep.subr.mxu0 0.0
  %480 = vmatpush2.msra.mxu0 0.0
  %481 = vmatprep.subr.mxu0 0.0
  %482 = vmatpush2.msra.mxu0 0.0
  %483 = vmatprep.subr.mxu0 0.0
  %484 = vmatpush2.msra.mxu0 0.0
  %485 = vmatprep.subr.mxu0 0.0
  %486 = vmatpush2.msra.mxu0 0.0
  %487 = vmatprep.subr.mxu0 0.0
  %488 = vmatpush2.msra.mxu0 0.0
  %489 = vmatprep.subr.mxu0 0.0
  %490 = vmatpush2.msra.mxu0 0.0
  %491 = vmatprep.subr.mxu0 0.0
  %492 = vmatpush2.msra.mxu0 0.0
  %493 = vmatprep.subr.mxu0 0.0
  %494 = vmatpush2.msra.mxu0 0.0
  %495 = vmatprep.subr.mxu0 0.0
  %496 = vmatpush2.msra.mxu0 0.0
  %497 = vmatprep.subr.mxu0 0.0
  %498 = vmatpush2.msra.mxu0 0.0
  %499 = vmatprep.subr.mxu0 0.0
  %500 = vmatpush2.msra.mxu0 0.0
  %501 = vmatprep.subr.mxu0 0.0
  %502 = vmatpush2.msra.mxu0 0.0
  %503 = vmatprep.mubr.f32.mxu0 0.0
  %504 = vmatmul.mubr.f32.gmra.mxu0 %v434
  %v505 = vpop.f32.mrf.mxu0
  %v506 = vadd.f32 0.0, %v505
  %v507 = vpop.f32.mrf.mxu0
  %508 = vmatprep.mubr.f32.mxu0 0.0
  %509 = vmatmul.mubr.f32.gmra.mxu0 %v437
  %v510 = vpop.f32.mrf.mxu0
  %v511 = vadd.f32 0.0, %v510
  %v512 = vpop.f32.mrf.mxu0
  %513 = vdwg.mxu0
  %516 = vrot.lane.b32.xlu0 %v506, 32
  %v517 = vpop.permute.xlu0 %516
  %518 = vrot.lane.b32.xlu0 %v511, 32
  %v519 = vpop.permute.xlu0 %518
  %v522 = vadd.f32 %v241, %v517
  %v523 = vadd.f32 %v242, %v519
  %v524 = vmax.f32 %v522, 0.0
  %v525 = vmax.f32 %v523, 0.0
  %v526 = vld [vmem:[%s11] sm:$0xff]
  %v527 = vld [vmem:[%s11 + $0x8] sm:$0xff]
  %v528 = vld [vmem:[%s11 + $0x10] sm:$0xff]
  %v529 = vld [vmem:[%s11 + $0x18] sm:$0xff]
  %v530 = vld [vmem:[%s12] sm:$0x1]
  %v532 = vlaneseq
  %v533 = vshrl.u32 %v532, 7
  %v534 = vsub.s32 0, %v533
  %v535 = vrot.slane %v530, %v534
  %539 = vrot.lane.b32.xlu0 %v524, 96
  %v540 = vpop.permute.xlu0 %539
  %541 = vrot.lane.b32.xlu0 %v525, 96
  %v542 = vpop.permute.xlu0 %541
  %v543 = vsel %vm256, %v540, 0
  %v545 = vsel %vm256, %v542, 0
  %547 = vmatprep.subr.mxu0 0.0
  %548 = vmatpush1.msra.mxu0 0.0
  %549 = vmatprep.subr.mxu0 0.0
  %550 = vmatpush1.msra.mxu0 0.0
  %551 = vmatprep.subr.mxu0 0.0
  %552 = vmatpush1.msra.mxu0 0.0
  %553 = vmatprep.subr.mxu0 0.0
  %554 = vmatpush1.msra.mxu0 0.0
  %555 = vmatprep.subr.mxu0 0.0
  %556 = vmatpush1.msra.mxu0 0.0
  %557 = vmatprep.subr.mxu0 0.0
  %558 = vmatpush1.msra.mxu0 0.0
  %559 = vmatprep.subr.mxu0 0.0
  %560 = vmatpush1.msra.mxu0 0.0
  %561 = vmatprep.subr.mxu0 0.0
  %562 = vmatpush1.msra.mxu0 0.0
  %563 = vmatprep.subr.mxu0 0.0
  %564 = vmatpush1.msra.mxu0 0.0
  %565 = vmatprep.subr.mxu0 0.0
  %566 = vmatpush1.msra.mxu0 0.0
  %567 = vmatprep.subr.mxu0 0.0
  %568 = vmatpush1.msra.mxu0 0.0
  %569 = vmatprep.subr.mxu0 0.0
  %570 = vmatpush1.msra.mxu0 0.0
  %571 = vmatprep.subr.mxu0 0.0
  %572 = vmatpush1.msra.mxu0 %v529
  %573 = vmatprep.subr.mxu0 0.0
  %574 = vmatpush1.msra.mxu0 %v528
  %575 = vmatprep.subr.mxu0 0.0
  %576 = vmatpush1.msra.mxu0 %v527
  %577 = vmatprep.subr.mxu0 0.0
  %578 = vmatpush1.msra.mxu0 %v526
  %579 = vmatprep.subr.mxu0 0.0
  %580 = vmatpush2.msra.mxu0 0.0
  %581 = vmatprep.subr.mxu0 0.0
  %582 = vmatpush2.msra.mxu0 0.0
  %583 = vmatprep.subr.mxu0 0.0
  %584 = vmatpush2.msra.mxu0 0.0
  %585 = vmatprep.subr.mxu0 0.0
  %586 = vmatpush2.msra.mxu0 0.0
  %587 = vmatprep.subr.mxu0 0.0
  %588 = vmatpush2.msra.mxu0 0.0
  %589 = vmatprep.subr.mxu0 0.0
  %590 = vmatpush2.msra.mxu0 0.0
  %591 = vmatprep.subr.mxu0 0.0
  %592 = vmatpush2.msra.mxu0 0.0
  %593 = vmatprep.subr.mxu0 0.0
  %594 = vmatpush2.msra.mxu0 0.0
  %595 = vmatprep.subr.mxu0 0.0
  %596 = vmatpush2.msra.mxu0 0.0
  %597 = vmatprep.subr.mxu0 0.0
  %598 = vmatpush2.msra.mxu0 0.0
  %599 = vmatprep.subr.mxu0 0.0
  %600 = vmatpush2.msra.mxu0 0.0
  %601 = vmatprep.subr.mxu0 0.0
  %602 = vmatpush2.msra.mxu0 0.0
  %603 = vmatprep.subr.mxu0 0.0
  %604 = vmatpush2.msra.mxu0 0.0
  %605 = vmatprep.subr.mxu0 0.0
  %606 = vmatpush2.msra.mxu0 0.0
  %607 = vmatprep.subr.mxu0 0.0
  %608 = vmatpush2.msra.mxu0 0.0
  %609 = vmatprep.subr.mxu0 0.0
  %610 = vmatpush2.msra.mxu0 0.0
  %611 = vmatprep.mubr.f32.mxu0 0.0
  %612 = vmatmul.mubr.f32.gmra.mxu0 %v543
  %v613 = vpop.f32.mrf.mxu0
  %v614 = vadd.f32 %v535, %v613
  %v615 = vpop.f32.mrf.mxu0
  %616 = vmatprep.mubr.f32.mxu0 0.0
  %617 = vmatmul.mubr.f32.gmra.mxu0 %v545
  %v618 = vpop.f32.mrf.mxu0
  %v619 = vadd.f32 %v535, %v618
  %v620 = vpop.f32.mrf.mxu0
  %621 = vdwg.mxu0
  %v622 = vmax.f32 %v614, 0.0
  %v623 = vmax.f32 %v619, 0.0
  %v624 = vld [vmem:[%s13] sm:$0xff]
  %v625 = vld [vmem:[%s13 + $0x8] sm:$0xff]
  %v626 = vld [vmem:[%s13 + $0x10] sm:$0xff]
  %v627 = vld [vmem:[%s13 + $0x18] sm:$0xff]
  %v628 = vld [vmem:[%s14] sm:$0x1]
  %v630 = vlaneseq
  %v631 = vshrl.u32 %v630, 7
  %v632 = vsub.s32 0, %v631
  %v633 = vrot.slane %v628, %v632
  %v636 = vsel %vm256, %v622, 0
  %v639 = vsel %vm256, %v623, 0
  %641 = vmatprep.subr.mxu0 0.0
  %642 = vmatpush1.msra.mxu0 0.0
  %643 = vmatprep.subr.mxu0 0.0
  %644 = vmatpush1.msra.mxu0 0.0
  %645 = vmatprep.subr.mxu0 0.0
  %646 = vmatpush1.msra.mxu0 0.0
  %647 = vmatprep.subr.mxu0 0.0
  %648 = vmatpush1.msra.mxu0 0.0
  %649 = vmatprep.subr.mxu0 0.0
  %650 = vmatpush1.msra.mxu0 0.0
  %651 = vmatprep.subr.mxu0 0.0
  %652 = vmatpush1.msra.mxu0 0.0
  %653 = vmatprep.subr.mxu0 0.0
  %654 = vmatpush1.msra.mxu0 0.0
  %655 = vmatprep.subr.mxu0 0.0
  %656 = vmatpush1.msra.mxu0 0.0
  %657 = vmatprep.subr.mxu0 0.0
  %658 = vmatpush1.msra.mxu0 0.0
  %659 = vmatprep.subr.mxu0 0.0
  %660 = vmatpush1.msra.mxu0 0.0
  %661 = vmatprep.subr.mxu0 0.0
  %662 = vmatpush1.msra.mxu0 0.0
  %663 = vmatprep.subr.mxu0 0.0
  %664 = vmatpush1.msra.mxu0 0.0
  %665 = vmatprep.subr.mxu0 0.0
  %666 = vmatpush1.msra.mxu0 %v627
  %667 = vmatprep.subr.mxu0 0.0
  %668 = vmatpush1.msra.mxu0 %v626
  %669 = vmatprep.subr.mxu0 0.0
  %670 = vmatpush1.msra.mxu0 %v625
  %671 = vmatprep.subr.mxu0 0.0
  %672 = vmatpush1.msra.mxu0 %v624
  %673 = vmatprep.subr.mxu0 0.0
  %674 = vmatpush2.msra.mxu0 0.0
  %675 = vmatprep.subr.mxu0 0.0
  %676 = vmatpush2.msra.mxu0 0.0
  %677 = vmatprep.subr.mxu0 0.0
  %678 = vmatpush2.msra.mxu0 0.0
  %679 = vmatprep.subr.mxu0 0.0
  %680 = vmatpush2.msra.mxu0 0.0
  %681 = vmatprep.subr.mxu0 0.0
  %682 = vmatpush2.msra.mxu0 0.0
  %683 = vmatprep.subr.mxu0 0.0
  %684 = vmatpush2.msra.mxu0 0.0
  %685 = vmatprep.subr.mxu0 0.0
  %686 = vmatpush2.msra.mxu0 0.0
  %687 = vmatprep.subr.mxu0 0.0
  %688 = vmatpush2.msra.mxu0 0.0
  %689 = vmatprep.subr.mxu0 0.0
  %690 = vmatpush2.msra.mxu0 0.0
  %691 = vmatprep.subr.mxu0 0.0
  %692 = vmatpush2.msra.mxu0 0.0
  %693 = vmatprep.subr.mxu0 0.0
  %694 = vmatpush2.msra.mxu0 0.0
  %695 = vmatprep.subr.mxu0 0.0
  %696 = vmatpush2.msra.mxu0 0.0
  %697 = vmatprep.subr.mxu0 0.0
  %698 = vmatpush2.msra.mxu0 0.0
  %699 = vmatprep.subr.mxu0 0.0
  %700 = vmatpush2.msra.mxu0 0.0
  %701 = vmatprep.subr.mxu0 0.0
  %702 = vmatpush2.msra.mxu0 0.0
  %703 = vmatprep.subr.mxu0 0.0
  %704 = vmatpush2.msra.mxu0 0.0
  %705 = vmatprep.mubr.f32.mxu0 0.0
  %706 = vmatmul.mubr.f32.gmra.mxu0 %v636
  %v707 = vpop.f32.mrf.mxu0
  %v708 = vadd.f32 %v633, %v707
  %v709 = vpop.f32.mrf.mxu0
  %710 = vmatprep.mubr.f32.mxu0 0.0
  %711 = vmatmul.mubr.f32.gmra.mxu0 %v639
  %v712 = vpop.f32.mrf.mxu0
  %v713 = vadd.f32 %v633, %v712
  %v714 = vpop.f32.mrf.mxu0
  %715 = vdwg.mxu0
  %v716 = vmax.f32 %v708, 0.0
  %v717 = vmax.f32 %v713, 0.0
  %v718 = vand.u32 2147483647, %v708
  %v719 = vand.u32 2147483647, %v713
  %v720 = vsub.f32 0.0, %v718
  %v721 = vsub.f32 0.0, %v719
  %v722 = vmul.f32 %v720, 1.442695
  %v723 = vpow.pop %v722
  %v724 = vmul.f32 %v721, 1.442695
  %v725 = vpow.pop %v724
  %v726 = vadd.f32 %v723, 1.0
  %v727 = vlog2.pop %v726
  %v728 = vmul.f32 %v727, 0.6931472
  %v729 = vmul.f32 -0.5, %v723
  %v730 = vadd.f32 %v729, 1.0
  %v731 = vmul.f32 %v730, %v723
  %v732 = vand.u32 2147483647, %v723
  %vm733 = vcmp.lt.f32.partialorder %v732, 0.0004427343
  %v734 = vsel %vm733, %v731, %v728
  %v735 = vadd.f32 %v725, 1.0
  %v736 = vlog2.pop %v735
  %v737 = vmul.f32 %v736, 0.6931472
  %v738 = vmul.f32 -0.5, %v725
  %v739 = vadd.f32 %v738, 1.0
  %v740 = vmul.f32 %v739, %v725
  %v741 = vand.u32 2147483647, %v725
  %vm742 = vcmp.lt.f32.partialorder %v741, 0.0004427343
  %v743 = vsel %vm742, %v740, %v737
  %v744 = vadd.f32 %v716, %v734
  %v745 = vadd.f32 %v717, %v743
  %v746 = vmul.f32 %v424, %v52
  %v747 = vmul.f32 %v429, %v53
  %748 = vst.msk [vmem:[%s15] sm:$0xff] %vm71, %v746
  %749 = vst.msk [vmem:[%s15 + $0x8] sm:$0xff] %vm71, %v747
  %v750 = vadd.f32 %v744, 1e-05
  %v751 = vadd.f32 %v745, 1e-05
  %752 = vst.msk [vmem:[%s16] sm:$0xff] %vm71, %v750
  %753 = vst.msk [vmem:[%s16 + $0x8] sm:$0xff] %vm71, %v751
  // Predicated region
  $region62: #{tpu_custom_call.1} parent=0 // pred_check
    _
  $region63: #{tpu_custom_call.1} parent=0 // pred_check_branch
    %755 = sbr.rel (0) target = $region65
  $region64: #{tpu_custom_call.1} parent=0 // pred_region
    _
  $region65: #{tpu_custom_call.1} parent=0 // pred_fallthru
    _
  // Predicated region
  $region66: #{tpu_custom_call.1} parent=0 // pred_check
    _
  $region67: #{tpu_custom_call.1} parent=0 // pred_check_branch
    %757 = sbr.rel (0) target = $region69
  $region68: #{tpu_custom_call.1} parent=0 // pred_region
    _
  $region69: #{tpu_custom_call.1} parent=0 // pred_fallthru
    _
  // Predicated region
  $region70: #{tpu_custom_call.1} parent=0 // pred_check
    _
  $region71: #{tpu_custom_call.1} parent=0 // pred_check_branch
    %759 = sbr.rel (0) target = $region73
  $region72: #{tpu_custom_call.1} parent=0 // pred_region
    _
  $region73: #{tpu_custom_call.1} parent=0 // pred_fallthru
    _
  // Predicated region
  $region74: #{tpu_custom_call.1} parent=0 // pred_check
    _
  $region75: #{tpu_custom_call.1} parent=0 // pred_check_branch
    %761 = sbr.rel (0) target = $region77
  $region76: #{tpu_custom_call.1} parent=0 // pred_region
    _
  $region77: #{tpu_custom_call.1} parent=0 // pred_fallthru
    _

</llo_original>
